<compile_context>
chip_gen: v6e
topology: v6e:2x2x1
jax: 0.10.0
libtpu: 0.0.40
codegen_flags: <defaults>
</compile_context>

<pallas_src>
import jax
import jax.numpy as jnp
from jax.experimental import pallas as pl
from jax.experimental.pallas import tpu as pltpu


def _round_up(x, m):
    return ((x + m - 1) // m) * m


def _patch_embed_kernel(x_ref, w_ref, b_ref, o_ref):
    # x_ref: (TM, K)  w_ref: (K, Np)  b_ref: (1, Np)  o_ref: (TM, Np)
    x = x_ref[...].astype(jnp.float32)
    w = w_ref[...].astype(jnp.float32)
    acc = jnp.dot(x, w, preferred_element_type=jnp.float32)      # MXU
    o_ref[...] = (acc + b_ref[...].astype(jnp.float32)).astype(o_ref.dtype)


def patch_embedding(x, weight, bias, patch_size=4):
    """x: (B, C, H, W); weight: (E, C, P, P); bias: (E,) -> (B, H//P, W//P, E)."""
    B, C, H, W = x.shape
    E = weight.shape[0]
    P = patch_size
    assert H % P == 0 and W % P == 0, "spatial dims must be divisible by patch_size"
    Hp, Wp = H // P, W // P
    K = C * P * P
    M = B * Hp * Wp

    # ---- layout glue (plain JAX): non-overlapping patches -> GEMM rows ----
    # Ordering (c, ph, pw) matches the flattened Conv2d weight (E, C, P, P).
    patches = (
        x.reshape(B, C, Hp, P, Wp, P)
         .transpose(0, 2, 4, 1, 3, 5)
         .reshape(M, K)
    )
    w_flat = weight.reshape(E, K).T.astype(jnp.float32)           # (K, E)

    # ---- lane-dense N: pad embed_dim to a multiple of 128 ----
    Np = _round_up(max(E, 128), 128)
    w_pad = jnp.zeros((K, Np), jnp.float32).at[:, :E].set(w_flat)
    b_pad = jnp.zeros((1, Np), jnp.float32).at[0, :E].set(bias.astype(jnp.float32))

    # ---- M tiling: pipelined tiles, padded so the grid divides evenly ----
    TM = 256
    if M < TM:
        TM = max(8, _round_up(M, 8))
    M_pad = _round_up(M, TM)
    if M_pad != M:
        patches = jnp.zeros((M_pad, K), patches.dtype).at[:M].set(patches)

    grid = (M_pad // TM,)
    itemsize = int(jnp.dtype(patches.dtype).itemsize)

    out = pl.pallas_call(
        _patch_embed_kernel,
        out_shape=jax.ShapeDtypeStruct((M_pad, Np), jnp.float32),
        grid=grid,
        in_specs=[
            pl.BlockSpec((TM, K), lambda i: (i, 0)),   # patch tile: streamed / pipelined
            pl.BlockSpec((K, Np), lambda i: (0, 0)),   # weight: resident in VMEM
            pl.BlockSpec((1, Np), lambda i: (0, 0)),   # bias:   resident in VMEM
        ],
        out_specs=pl.BlockSpec((TM, Np), lambda i: (i, 0)),
        compiler_params=pltpu.CompilerParams(
            dimension_semantics=("parallel",),         # independent M tiles (2 TCs on v7x)
        ),
        cost_estimate=pl.CostEstimate(
            flops=2 * M_pad * K * Np,
            transcendentals=0,
            bytes_accessed=M_pad * K * itemsize + K * Np * 4 + M_pad * Np * 4,
        ),
    )(patches, w_pad, b_pad)

    return out[:M, :E].reshape(B, Hp, Wp, E)


if __name__ == "__main__":
    key = jax.random.PRNGKey(0)
    k_x, k_w, k_b = jax.random.split(key, 3)

    # Small shapes consistent with the module defaults: patch_size=4, in_channels=3, embed_dim=48.
    B, C, H, W = 2, 3, 16, 16
    P, E = 4, 48

    x = jax.random.normal(k_x, (B, C, H, W), dtype=jnp.float32)
    weight = jax.random.normal(k_w, (E, C, P, P), dtype=jnp.float32) * 0.05
    bias = jax.random.normal(k_b, (E,), dtype=jnp.float32) * 0.01

    out = patch_embedding(x, weight, bias, patch_size=P)
    out = jax.block_until_ready(out)

    # Reference: plain-JAX conv (same math as nn.Conv2d, stride == kernel_size), then NHWC permute.
    ref = jax.lax.conv_general_dilated(
        x, weight, window_strides=(P, P), padding="VALID",
        dimension_numbers=("NCHW", "OIHW", "NCHW"),
    )
    ref = jnp.transpose(ref, (0, 2, 3, 1)) + bias

    assert out.shape == (B, H // P, W // P, E)
    assert jnp.allclose(out, ref, atol=1e-4, rtol=1e-4)

    print("KERNEL_OK")
</pallas_src>

<mosaic_0001>
module attributes {stable_mosaic.version = 11 : i64} {
  func.func @_patch_embed_kernel(%arg0: i32, %arg1: memref<32x48xf32, #tpu.memory_space<vmem>>, %arg2: memref<48x128xf32, #tpu.memory_space<vmem>>, %arg3: memref<1x128xf32, #tpu.memory_space<vmem>>, %arg4: memref<32x128xf32, #tpu.memory_space<vmem>>) attributes {dimension_semantics = [#tpu.dimension_semantics<parallel>], iteration_bounds = array<i64: 1>, scalar_prefetch = 0 : i64, scratch_operands = 0 : i64, tpu.core_type = #tpu.core_type<tc>, window_params = [{transform_indices = @transform_0, window_bounds = array<i64: 32, 48>}, {pipeline_mode = #tpu.pipeline_mode<synchronous>, transform_indices = @transform_1, window_bounds = array<i64: 48, 128>}, {pipeline_mode = #tpu.pipeline_mode<synchronous>, transform_indices = @transform_2, window_bounds = array<i64: 1, 128>}, {transform_indices = @transform_3, window_bounds = array<i64: 32, 128>}]} {
    %c0 = arith.constant 0 : index
    %c0_0 = arith.constant 0 : index
    %0 = vector.load %arg1[%c0, %c0_0] : memref<32x48xf32, #tpu.memory_space<vmem>>, vector<32x48xf32>
    %c0_1 = arith.constant 0 : index
    %c0_2 = arith.constant 0 : index
    %1 = vector.load %arg2[%c0_1, %c0_2] : memref<48x128xf32, #tpu.memory_space<vmem>>, vector<48x128xf32>
    %cst = arith.constant dense<0.000000e+00> : vector<32x128xf32>
    %2 = tpu.matmul %0, %1, %cst {dimension_numbers = #tpu.dot_dimension_numbers<[1], [0], [0], [1], [0, 0, 1, 1], [], []>} : vector<32x48xf32>, vector<48x128xf32>, vector<32x128xf32> -> vector<32x128xf32>
    %c0_3 = arith.constant 0 : index
    %c0_4 = arith.constant 0 : index
    %3 = vector.load %arg3[%c0_3, %c0_4] : memref<1x128xf32, #tpu.memory_space<vmem>>, vector<1x128xf32>
    %4 = vector.broadcast %3 : vector<1x128xf32> to vector<32x128xf32>
    %5 = arith.addf %2, %4 : vector<32x128xf32>
    %c0_5 = arith.constant 0 : index
    %c0_6 = arith.constant 0 : index
    %6 = vector.load %arg4[%c0_5, %c0_6] : memref<32x128xf32, #tpu.memory_space<vmem>>, vector<32x128xf32>
    tpu.vector_store %arg4[%c0_5, %c0_6], %5 {strides = array<i32>} : memref<32x128xf32, #tpu.memory_space<vmem>>, vector<32x128xf32>,
    return
  }
  func.func @transform_0(%arg0: i32) -> (i32, i32) {
    %c0_i32 = arith.constant 0 : i32
    %c0_i32_0 = arith.constant 0 : i32
    return %arg0, %c0_i32 : i32, i32
  }
  func.func @transform_1(%arg0: i32) -> (i32, i32) {
    %c0_i32 = arith.constant 0 : i32
    %c0_i32_0 = arith.constant 0 : i32
    %c0_i32_1 = arith.constant 0 : i32
    return %c0_i32, %c0_i32_0 : i32, i32
  }
  func.func @transform_2(%arg0: i32) -> (i32, i32) {
    %c0_i32 = arith.constant 0 : i32
    %c0_i32_0 = arith.constant 0 : i32
    %c0_i32_1 = arith.constant 0 : i32
    return %c0_i32, %c0_i32_0 : i32, i32
  }
  func.func @transform_3(%arg0: i32) -> (i32, i32) {
    %c0_i32 = arith.constant 0 : i32
    %c0_i32_0 = arith.constant 0 : i32
    return %arg0, %c0_i32 : i32, i32
  }
}

</mosaic_0001>

<llo_original>
// kernel: tpu_custom_call.1
$region0: #{tpu_custom_call.1}
  #allocation0 [shape = 'u32[]', space=smem, size = 0x4, offset = 0x4, fixed_abs, tag = 'smem constant byte address 0x4 - core index']
  #allocation1 [shape = 'u32[144,128]{1,0:T(1,128)}', space=vmem, size = 0x12000, scoped, tag = 'internal scratch']
  %s0 = inlined_call_operand.hbm [shape: f32[32,48], index: 0, kind: input, shape index: {}]
  %s1 = inlined_call_operand.hbm [shape: f32[48,128], index: 1, kind: input, shape index: {}]
  %s2 = inlined_call_operand.vmem [shape: f32[1,128], index: 2, kind: input, shape index: {}]
  %s3 = inlined_call_operand.hbm [shape: f32[32,128], index: 3, kind: output, shape index: {}]
  %s4 = sld [smem:[#allocation0]]
  $region30: #{tpu_custom_call.1} parent=0
    _
  %s6 = ssub.s32 1, %s4
  %s7 = scalar_select 0, %s6, %s4
  $region1: #{tpu_custom_call.1} parent=0
    #allocation2 [shape = 'u8[16384]{0}', space=vmem, size = 0x4000, scoped, tag = 'input window, operand 0, single buffered']
    #allocation3 [shape = 's32[1]{0}', space=sflag, size = 0x4, scoped, tag = 'scoped memory for tpu_custom_call.1']
    #allocation4 [shape = 's32[1]{0}', space=sflag, size = 0x4, scoped, tag = 'scoped memory for tpu_custom_call.1']
    #allocation5 [shape = 'u8[24576]{0}', space=vmem, size = 0x6000, scoped, tag = 'input window, operand 1, single buffered']
    #allocation6 [shape = 's32[1]{0}', space=sflag, size = 0x4, scoped, tag = 'scoped memory for tpu_custom_call.1']
    #allocation7 [shape = 'u8[16384]{0}', space=vmem, size = 0x4000, scoped, tag = 'output window, operand 0, single buffered']
    %8 = vsyncpa [#allocation3], 0
    %9 = vsyncpa [#allocation6], 0
    %10 = vsyncpa [#allocation4], 0
    // Predicated region
    $region2: #{tpu_custom_call.1} parent=1 // pred_check
      _
    $region3: #{tpu_custom_call.1} parent=1 // pred_check_branch
      %12 = sbr.rel (0) target = $region5
    $region4: #{tpu_custom_call.1} parent=1 // pred_region
      %s14 = ssub.s32 512, 512
      %15 = vsyncadd [#allocation3], %s14
      %s16 = sshll.u32 [#allocation2], 4
      %s17 = int_to_ptr.vmem [resolvable:$true] %s16
      %22 = dma.hbm_to_vmem [thread:$0]  %s0, 512, %s17, [#allocation3], 128, 128, 8
    $region5: #{tpu_custom_call.1} parent=1 // pred_fallthru
      _
    // Predicated region
    $region6: #{tpu_custom_call.1} parent=1 // pred_check
      _
    $region7: #{tpu_custom_call.1} parent=1 // pred_check_branch
      %24 = sbr.rel (0) target = $region9
    $region8: #{tpu_custom_call.1} parent=1 // pred_region
      %s26 = ssub.s32 768, 768
      %27 = vsyncadd [#allocation6], %s26
      %s28 = sshll.u32 [#allocation5], 4
      %s29 = int_to_ptr.vmem [resolvable:$true] %s28
      %34 = dma.hbm_to_vmem [thread:$0]  %s1, 768, %s29, [#allocation6], 128, 128, 8
    $region9: #{tpu_custom_call.1} parent=1 // pred_fallthru
      _
    // Predicated region
    $region10: #{tpu_custom_call.1} parent=1 // pred_check
      _
    $region11: #{tpu_custom_call.1} parent=1 // pred_check_branch
      %36 = sbr.rel (0) target = $region13
    $region12: #{tpu_custom_call.1} parent=1 // pred_region
      _
    $region13: #{tpu_custom_call.1} parent=1 // pred_fallthru
      _
    // Predicated region
    $region14: #{tpu_custom_call.1} parent=1 // pred_check
      _
    $region15: #{tpu_custom_call.1} parent=1 // pred_check_branch
      %38 = sbr.rel (0) target = $region17
    $region16: #{tpu_custom_call.1} parent=1 // pred_region
      %39 = dma.done [#allocation3], 512
    $region17: #{tpu_custom_call.1} parent=1 // pred_fallthru
      _
    // Predicated region
    $region18: #{tpu_custom_call.1} parent=1 // pred_check
      _
    $region19: #{tpu_custom_call.1} parent=1 // pred_check_branch
      %41 = sbr.rel (0) target = $region21
    $region20: #{tpu_custom_call.1} parent=1 // pred_region
      %42 = dma.done [#allocation6], 768
    $region21: #{tpu_custom_call.1} parent=1 // pred_fallthru
      _
    %v43 = vld [vmem:[#allocation2] sm:$0xff]
    %v44 = vld [vmem:[#allocation2 + $0x8] sm:$0xff]
    %v45 = vld [vmem:[#allocation2 + $0x10] sm:$0xff]
    %v46 = vld [vmem:[#allocation2 + $0x18] sm:$0xff]
    %v47 = vld [vmem:[#allocation5] sm:$0xff]
    %v48 = vld [vmem:[#allocation5 + $0x8] sm:$0xff]
    %v49 = vld [vmem:[#allocation5 + $0x10] sm:$0xff]
    %v50 = vld [vmem:[#allocation5 + $0x18] sm:$0xff]
    %v51 = vld [vmem:[#allocation5 + $0x20] sm:$0xff]
    %v52 = vld [vmem:[#allocation5 + $0x28] sm:$0xff]
    %v53 = vld [vmem:[%s2] sm:$0x1]
    %v55 = vlaneseq
    %v56 = vshrl.u32 %v55, 7
    %v57 = vsub.s32 0, %v56
    %v58 = vrot.slane %v53, %v57
    %vm60 = vcmask 392192
    %v62 = vsel %vm60, %v43, 0
    %v65 = vsel %vm60, %v44, 0
    %v68 = vsel %vm60, %v45, 0
    %v71 = vsel %vm60, %v46, 0
    %73 = vmatprep.subr.mxu0 0.0
    %74 = vmatpush1.msra.mxu0 0.0
    %75 = vmatprep.subr.mxu0 0.0
    %76 = vmatpush1.msra.mxu0 0.0
    %77 = vmatprep.subr.mxu0 0.0
    %78 = vmatpush1.msra.mxu0 0.0
    %79 = vmatprep.subr.mxu0 0.0
    %80 = vmatpush1.msra.mxu0 0.0
    %81 = vmatprep.subr.mxu0 0.0
    %82 = vmatpush1.msra.mxu0 0.0
    %83 = vmatprep.subr.mxu0 0.0
    %84 = vmatpush1.msra.mxu0 0.0
    %85 = vmatprep.subr.mxu0 0.0
    %86 = vmatpush1.msra.mxu0 0.0
    %87 = vmatprep.subr.mxu0 0.0
    %88 = vmatpush1.msra.mxu0 0.0
    %89 = vmatprep.subr.mxu0 0.0
    %90 = vmatpush1.msra.mxu0 0.0
    %91 = vmatprep.subr.mxu0 0.0
    %92 = vmatpush1.msra.mxu0 0.0
    %93 = vmatprep.subr.mxu0 0.0
    %94 = vmatpush1.msra.mxu0 %v52
    %95 = vmatprep.subr.mxu0 0.0
    %96 = vmatpush1.msra.mxu0 %v51
    %97 = vmatprep.subr.mxu0 0.0
    %98 = vmatpush1.msra.mxu0 %v50
    %99 = vmatprep.subr.mxu0 0.0
    %100 = vmatpush1.msra.mxu0 %v49
    %101 = vmatprep.subr.mxu0 0.0
    %102 = vmatpush1.msra.mxu0 %v48
    %103 = vmatprep.subr.mxu0 0.0
    %104 = vmatpush1.msra.mxu0 %v47
    %105 = vmatprep.subr.mxu0 0.0
    %106 = vmatpush2.msra.mxu0 0.0
    %107 = vmatprep.subr.mxu0 0.0
    %108 = vmatpush2.msra.mxu0 0.0
    %109 = vmatprep.subr.mxu0 0.0
    %110 = vmatpush2.msra.mxu0 0.0
    %111 = vmatprep.subr.mxu0 0.0
    %112 = vmatpush2.msra.mxu0 0.0
    %113 = vmatprep.subr.mxu0 0.0
    %114 = vmatpush2.msra.mxu0 0.0
    %115 = vmatprep.subr.mxu0 0.0
    %116 = vmatpush2.msra.mxu0 0.0
    %117 = vmatprep.subr.mxu0 0.0
    %118 = vmatpush2.msra.mxu0 0.0
    %119 = vmatprep.subr.mxu0 0.0
    %120 = vmatpush2.msra.mxu0 0.0
    %121 = vmatprep.subr.mxu0 0.0
    %122 = vmatpush2.msra.mxu0 0.0
    %123 = vmatprep.subr.mxu0 0.0
    %124 = vmatpush2.msra.mxu0 0.0
    %125 = vmatprep.subr.mxu0 0.0
    %126 = vmatpush2.msra.mxu0 0.0
    %127 = vmatprep.subr.mxu0 0.0
    %128 = vmatpush2.msra.mxu0 0.0
    %129 = vmatprep.subr.mxu0 0.0
    %130 = vmatpush2.msra.mxu0 0.0
    %131 = vmatprep.subr.mxu0 0.0
    %132 = vmatpush2.msra.mxu0 0.0
    %133 = vmatprep.subr.mxu0 0.0
    %134 = vmatpush2.msra.mxu0 0.0
    %135 = vmatprep.subr.mxu0 0.0
    %136 = vmatpush2.msra.mxu0 0.0
    %137 = vmatprep.mubr.f32.mxu0 0.0
    %138 = vmatmul.mubr.f32.gmra.mxu0 %v62
    %v139 = vpop.f32.mrf.mxu0
    %v140 = vadd.f32 %v58, %v139
    %v141 = vpop.f32.mrf.mxu0
    %142 = vmatprep.mubr.f32.mxu0 0.0
    %143 = vmatmul.mubr.f32.gmra.mxu0 %v65
    %v144 = vpop.f32.mrf.mxu0
    %v145 = vadd.f32 %v58, %v144
    %v146 = vpop.f32.mrf.mxu0
    %147 = vmatprep.mubr.f32.mxu0 0.0
    %148 = vmatmul.mubr.f32.gmra.mxu0 %v68
    %v149 = vpop.f32.mrf.mxu0
    %v150 = vadd.f32 %v58, %v149
    %v151 = vpop.f32.mrf.mxu0
    %152 = vmatprep.mubr.f32.mxu0 0.0
    %153 = vmatmul.mubr.f32.gmra.mxu0 %v71
    %v154 = vpop.f32.mrf.mxu0
    %v155 = vadd.f32 %v58, %v154
    %v156 = vpop.f32.mrf.mxu0
    %157 = vdwg.mxu0
    %158 = vst [vmem:[#allocation7] sm:$0xff] %v140
    %159 = vst [vmem:[#allocation7 + $0x8] sm:$0xff] %v145
    %160 = vst [vmem:[#allocation7 + $0x10] sm:$0xff] %v150
    %161 = vst [vmem:[#allocation7 + $0x18] sm:$0xff] %v155
    // Predicated region
    $region22: #{tpu_custom_call.1} parent=1 // pred_check
      _
    $region23: #{tpu_custom_call.1} parent=1 // pred_check_branch
      %163 = sbr.rel (0) target = $region25
    $region24: #{tpu_custom_call.1} parent=1 // pred_region
      %s165 = ssub.s32 512, 512
      %166 = vsyncadd [#allocation4], %s165
      %s167 = sshll.u32 [#allocation7], 4
      %s168 = int_to_ptr.vmem [resolvable:$true] %s167
      %173 = dma.vmem_to_hbm [thread:$0]  %s168, 512, %s3, [#allocation4], 128, 128, 8
    $region25: #{tpu_custom_call.1} parent=1 // pred_fallthru
      _
    // Predicated region
    $region26: #{tpu_custom_call.1} parent=1 // pred_check
      _
    $region27: #{tpu_custom_call.1} parent=1 // pred_check_branch
      %175 = sbr.rel (0) target = $region29
    $region28: #{tpu_custom_call.1} parent=1 // pred_region
      %176 = dma.done [#allocation4], 512
    $region29: #{tpu_custom_call.1} parent=1 // pred_fallthru
      _
    %177 = vsyncpa [#allocation3], 1
    %178 = vsyncpa [#allocation6], 1
    %179 = vsyncpa [#allocation4], 1

</llo_original>
